<compile_context>
chip_gen: v5e
topology: v5e:2x2
jax: 0.10.0
libtpu: 0.0.40
codegen_flags: <defaults>
</compile_context>

<pallas_src>
import jax
import jax.numpy as jnp
from jax.experimental import pallas as pl
from jax.experimental.pallas import tpu as pltpu

# ----------------------------- configuration -------------------------------
INPUT_DIM = 32        # input_dim
REG_DIM = 32          # regression_dim
OUTPUT_DIM = 16       # output_dim
N_BLOCKS = 2          # n_blocks
NCE_HID = 32          # hidden width of process_unit('linear', 1, 32)
BATCH = 8
LANES = 128

# ---- packed parameter slab layout (single lane-dense f32 [72, 128]) --------
# rows [ 0,32): lanes [0,32)=w_ion  [32,64)=w_nce2  [64,80)=w_out  rest 0
# rows [32,64): lanes [0,128) = [w_a0 | w_b0 | w_a1 | w_b1]
# row  64     : [b_ion | b_nce2 | w_nce1 | b_nce1]
# row  65     : [b_a0 | b_b0 | b_a1 | b_b1]
# row  66     : b_out at lanes [64,80), rest 0  (aligned with the output lanes)
_R_W = 0
_R_WRES = _R_W + REG_DIM           # 32
_R_VEC = _R_WRES + REG_DIM         # 64
SLAB_ROWS = _R_VEC + 8             # 72 rows (multiple of 8) -> one ~36 KiB DMA
_L_OUT = 2 * REG_DIM               # 64: lane offset of w_out / b_out / result
_L_NCE = 2 * REG_DIM               # 64: lane offset of nce / w_nce1 in their rows


def _act(x):
    # act_fx == 'relu'
    return jnp.maximum(x, 0.0)


# ------------------------------- kernel ------------------------------------
def hcd_decoder_kernel(x_ref, p_ref, out_ref):
    """x_ref: [B, 128] packed activations (ion lanes 0:32, nce bcast lanes 64:96).
    p_ref: [72, 128] packed params.  out_ref: [B, 128] (result in lanes 64:80)."""
    xin = x_ref[...]                                       # [B, 128]
    ion = xin[:, 0:INPUT_DIM]                              # [B, 32]
    nce_b = xin[:, _L_NCE:_L_NCE + NCE_HID]                # [B, 32] (nce broadcast)

    w_rows = p_ref[pl.ds(_R_W, REG_DIM), :]                # [32,128] w_ion|w_nce2|w_out
    w_res = p_ref[pl.ds(_R_WRES, REG_DIM), :]              # [32,128] resnet weights
    vecs = p_ref[pl.ds(_R_VEC, 8), :]                      # [8, 128] biases / w_nce1

    b_ion = vecs[0:1, 0:REG_DIM]                           # [1, 32]
    b_nce2 = vecs[0:1, REG_DIM:2 * REG_DIM]                # [1, 32]
    w_nce1 = vecs[0:1, _L_NCE:_L_NCE + NCE_HID]            # [1, 32]
    b_nce1 = vecs[0:1, _L_NCE + NCE_HID:_L_NCE + 2 * NCE_HID]  # [1, 32]
    b_res = vecs[1:2, :]                                   # [1, 128]
    b_out_row = vecs[2:3, :]                               # [1, 128] (b_out @ lanes 64:80)

    # process_unit('linear', 1, 32): K=1 contraction == lane-aligned broadcast
    # multiply on the VPU (no MXU push for a rank-1 outer product).
    h = _act(nce_b * w_nce1 + b_nce1)                      # [B, 32]

    # Prologue: two lane-adjacent [B,32]@[32,32] matmuls, results multiplied
    # directly (no concatenate, no lane-offset split).
    ion_embed = jnp.dot(ion, w_rows[:, 0:REG_DIM],
                        preferred_element_type=jnp.float32) + b_ion
    nce_embed = jnp.dot(h, w_rows[:, REG_DIM:2 * REG_DIM],
                        preferred_element_type=jnp.float32) + b_nce2
    x = ion_embed * nce_embed                              # [B, 32]

    # resnet blocks — weights packed lane-dense in one [32, 128] tile.
    for i in range(N_BLOCKS):
        lo = 2 * REG_DIM * i
        w_a = w_res[:, lo:lo + REG_DIM]
        w_b = w_res[:, lo + REG_DIM:lo + 2 * REG_DIM]
        b_a = b_res[:, lo:lo + REG_DIM]
        b_b = b_res[:, lo + REG_DIM:lo + 2 * REG_DIM]
        y = _act(jnp.dot(x, w_a, preferred_element_type=jnp.float32) + b_a)
        y = jnp.dot(y, w_b, preferred_element_type=jnp.float32) + b_b
        x = _act(x + y)

    # Output head: contract against the full shared [32,128] weight rows so the
    # store is a single unmasked lane-dense [B,128] tile; the real result lands
    # in lanes [64,80) (w_out's lanes), bias row is zero everywhere else.
    out_ref[...] = (
        jnp.dot(x, w_rows, preferred_element_type=jnp.float32) + b_out_row
    ).astype(out_ref.dtype)


# ------------------------------- wrapper ------------------------------------
@jax.jit
def hcd_decoder_forward(ion_encoded, nce, param_slab):
    b = ion_encoded.shape[0]
    # Host-pack ion + nce into one lane-dense [B, 128] tile (2 input DMAs total).
    xin = jnp.zeros((b, LANES), jnp.float32)
    xin = xin.at[:, 0:INPUT_DIM].set(ion_encoded.astype(jnp.float32))
    xin = xin.at[:, _L_NCE:_L_NCE + NCE_HID].set(
        jnp.broadcast_to(nce.astype(jnp.float32), (b, NCE_HID)))

    vmem_spec = pl.BlockSpec(memory_space=pltpu.MemorySpace.VMEM)
    out_full = pl.pallas_call(
        hcd_decoder_kernel,
        out_shape=jax.ShapeDtypeStruct((b, LANES), jnp.float32),
        in_specs=[vmem_spec, vmem_spec],
        out_specs=vmem_spec,
    )(xin, param_slab)
    # Lane-dense store inside the kernel; slice the real result here.
    return out_full[:, _L_OUT:_L_OUT + OUTPUT_DIM]


# -------------------------- parameter construction --------------------------
def init_params(key):
    ks = jax.random.split(key, 12)

    def dense(k, shape, scale):
        return scale * jax.random.normal(k, shape, dtype=jnp.float32)

    return {
        "w_ion": dense(ks[0], (INPUT_DIM, REG_DIM), INPUT_DIM ** -0.5),
        "b_ion": dense(ks[1], (1, REG_DIM), 0.02),
        "w_nce1": dense(ks[2], (1, NCE_HID), 1.0),
        "b_nce1": dense(ks[3], (1, NCE_HID), 0.02),
        "w_nce2": dense(ks[4], (NCE_HID, REG_DIM), NCE_HID ** -0.5),
        "b_nce2": dense(ks[5], (1, REG_DIM), 0.02),
        "w_res_a": dense(ks[6], (N_BLOCKS, REG_DIM, REG_DIM), REG_DIM ** -0.5),
        "b_res_a": dense(ks[7], (N_BLOCKS, 1, REG_DIM), 0.02),
        "w_res_b": dense(ks[8], (N_BLOCKS, REG_DIM, REG_DIM), REG_DIM ** -0.5),
        "b_res_b": dense(ks[9], (N_BLOCKS, 1, REG_DIM), 0.02),
        "w_out": dense(ks[10], (REG_DIM, OUTPUT_DIM), REG_DIM ** -0.5),
        "b_out": dense(ks[11], (1, OUTPUT_DIM), 0.02),
    }


def pack_params(p):
    """Pack all parameters into one dense lane-aligned [72, 128] f32 slab (once at init)."""
    assert INPUT_DIM == REG_DIM == NCE_HID == 32, "row sharing assumes 32-wide dims"
    assert 2 * N_BLOCKS * REG_DIM <= LANES, "resnet lane packing assumes n_blocks <= 2"
    assert _L_OUT + OUTPUT_DIM <= LANES
    slab = jnp.zeros((SLAB_ROWS, LANES), jnp.float32)

    # shared weight rows 0..31: [w_ion | w_nce2 | w_out | 0]
    slab = slab.at[_R_W:_R_W + INPUT_DIM, 0:REG_DIM].set(p["w_ion"])
    slab = slab.at[_R_W:_R_W + NCE_HID, REG_DIM:2 * REG_DIM].set(p["w_nce2"])
    slab = slab.at[_R_W:_R_W + REG_DIM, _L_OUT:_L_OUT + OUTPUT_DIM].set(p["w_out"])

    # resnet weights rows 32..63: [w_a0 | w_b0 | w_a1 | w_b1]
    for i in range(N_BLOCKS):
        lo = 2 * REG_DIM * i
        slab = slab.at[_R_WRES:_R_WRES + REG_DIM, lo:lo + REG_DIM].set(p["w_res_a"][i])
        slab = slab.at[_R_WRES:_R_WRES + REG_DIM,
                       lo + REG_DIM:lo + 2 * REG_DIM].set(p["w_res_b"][i])

    # vector row 0: [b_ion | b_nce2 | w_nce1 | b_nce1]
    slab = slab.at[_R_VEC, 0:REG_DIM].set(p["b_ion"][0])
    slab = slab.at[_R_VEC, REG_DIM:2 * REG_DIM].set(p["b_nce2"][0])
    slab = slab.at[_R_VEC, _L_NCE:_L_NCE + NCE_HID].set(p["w_nce1"][0])
    slab = slab.at[_R_VEC, _L_NCE + NCE_HID:_L_NCE + 2 * NCE_HID].set(p["b_nce1"][0])

    # vector row 1: resnet biases [b_a0 | b_b0 | b_a1 | b_b1]
    for i in range(N_BLOCKS):
        lo = 2 * REG_DIM * i
        slab = slab.at[_R_VEC + 1, lo:lo + REG_DIM].set(p["b_res_a"][i, 0])
        slab = slab.at[_R_VEC + 1, lo + REG_DIM:lo + 2 * REG_DIM].set(p["b_res_b"][i, 0])

    # vector row 2: b_out at the output lanes
    slab = slab.at[_R_VEC + 2, _L_OUT:_L_OUT + OUTPUT_DIM].set(p["b_out"][0])
    return slab


# ------------------------ pure-JAX reference (check) -------------------------
def reference_forward(ion_encoded, nce, p):
    ion_embed = ion_encoded @ p["w_ion"] + p["b_ion"]
    h = _act(nce @ p["w_nce1"] + p["b_nce1"])
    nce_embed = h @ p["w_nce2"] + p["b_nce2"]
    x = ion_embed * nce_embed
    for i in range(N_BLOCKS):
        y = _act(x @ p["w_res_a"][i] + p["b_res_a"][i])
        y = y @ p["w_res_b"][i] + p["b_res_b"][i]
        x = _act(x + y)
    return x @ p["w_out"] + p["b_out"]


# --------------------------------- main --------------------------------------
if __name__ == "__main__":
    key = jax.random.PRNGKey(0)
    k_ion, k_nce, k_params = jax.random.split(key, 3)

    ion_encoded = jax.random.normal(k_ion, (BATCH, INPUT_DIM), dtype=jnp.float32)
    nce = jax.random.uniform(k_nce, (BATCH, 1), dtype=jnp.float32) * 0.4 + 0.2

    params = init_params(k_params)
    param_slab = jax.block_until_ready(pack_params(params))   # packed once at init

    out = hcd_decoder_forward(ion_encoded, nce, param_slab)
    out = jax.block_until_ready(out)

    ref = reference_forward(ion_encoded, nce, params)
    assert out.shape == (BATCH, OUTPUT_DIM)
    assert jnp.allclose(out, ref, atol=1e-4, rtol=1e-4), "mismatch vs JAX reference"

    print("KERNEL_OK")
</pallas_src>

<mosaic_0001>
module attributes {stable_mosaic.version = 11 : i64} {
  func.func @hcd_decoder_kernel(%arg0: memref<8x128xf32, #tpu.memory_space<vmem>>, %arg1: memref<72x128xf32, #tpu.memory_space<vmem>>, %arg2: memref<8x128xf32, #tpu.memory_space<vmem>>) attributes {dimension_semantics = [], scalar_prefetch = 0 : i64, scratch_operands = 0 : i64, tpu.core_type = #tpu.core_type<tc>} {
    %c0 = arith.constant 0 : index
    %c0_0 = arith.constant 0 : index
    %0 = vector.load %arg0[%c0, %c0_0] : memref<8x128xf32, #tpu.memory_space<vmem>>, vector<8x128xf32>
    %1 = vector.extract_strided_slice %0 {offsets = [0, 0], sizes = [8, 32], strides = [1, 1]} : vector<8x128xf32> to vector<8x32xf32>
    %2 = vector.extract_strided_slice %0 {offsets = [0, 64], sizes = [8, 32], strides = [1, 1]} : vector<8x128xf32> to vector<8x32xf32>
    %c0_1 = arith.constant 0 : index
    %c0_2 = arith.constant 0 : index
    %3 = vector.load %arg1[%c0_1, %c0_2] : memref<72x128xf32, #tpu.memory_space<vmem>>, vector<32x128xf32>
    %c32 = arith.constant 32 : index
    %c0_3 = arith.constant 0 : index
    %4 = vector.load %arg1[%c32, %c0_3] : memref<72x128xf32, #tpu.memory_space<vmem>>, vector<32x128xf32>
    %c64 = arith.constant 64 : index
    %c0_4 = arith.constant 0 : index
    %5 = vector.load %arg1[%c64, %c0_4] : memref<72x128xf32, #tpu.memory_space<vmem>>, vector<8x128xf32>
    %6 = vector.extract_strided_slice %5 {offsets = [0, 0], sizes = [1, 32], strides = [1, 1]} : vector<8x128xf32> to vector<1x32xf32>
    %7 = vector.extract_strided_slice %5 {offsets = [0, 32], sizes = [1, 32], strides = [1, 1]} : vector<8x128xf32> to vector<1x32xf32>
    %8 = vector.extract_strided_slice %5 {offsets = [0, 64], sizes = [1, 32], strides = [1, 1]} : vector<8x128xf32> to vector<1x32xf32>
    %9 = vector.extract_strided_slice %5 {offsets = [0, 96], sizes = [1, 32], strides = [1, 1]} : vector<8x128xf32> to vector<1x32xf32>
    %10 = vector.extract_strided_slice %5 {offsets = [1, 0], sizes = [1, 128], strides = [1, 1]} : vector<8x128xf32> to vector<1x128xf32>
    %11 = vector.extract_strided_slice %5 {offsets = [2, 0], sizes = [1, 128], strides = [1, 1]} : vector<8x128xf32> to vector<1x128xf32>
    %12 = vector.broadcast %8 : vector<1x32xf32> to vector<8x32xf32>
    %13 = arith.mulf %2, %12 : vector<8x32xf32>
    %14 = vector.broadcast %9 : vector<1x32xf32> to vector<8x32xf32>
    %15 = arith.addf %13, %14 : vector<8x32xf32>
    %cst = arith.constant 0.000000e+00 : f32
    %16 = vector.broadcast %cst : f32 to vector<8x32xf32>
    %17 = arith.maximumf %15, %16 : vector<8x32xf32>
    %18 = vector.extract_strided_slice %3 {offsets = [0, 0], sizes = [32, 32], strides = [1, 1]} : vector<32x128xf32> to vector<32x32xf32>
    %cst_5 = arith.constant dense<0.000000e+00> : vector<8x32xf32>
    %19 = tpu.matmul %1, %18, %cst_5 {dimension_numbers = #tpu.dot_dimension_numbers<[1], [0], [0], [1], [0, 0, 1, 1], [], []>} : vector<8x32xf32>, vector<32x32xf32>, vector<8x32xf32> -> vector<8x32xf32>
    %20 = vector.broadcast %6 : vector<1x32xf32> to vector<8x32xf32>
    %21 = arith.addf %19, %20 : vector<8x32xf32>
    %22 = vector.extract_strided_slice %3 {offsets = [0, 32], sizes = [32, 32], strides = [1, 1]} : vector<32x128xf32> to vector<32x32xf32>
    %cst_6 = arith.constant dense<0.000000e+00> : vector<8x32xf32>
    %23 = tpu.matmul %17, %22, %cst_6 {dimension_numbers = #tpu.dot_dimension_numbers<[1], [0], [0], [1], [0, 0, 1, 1], [], []>} : vector<8x32xf32>, vector<32x32xf32>, vector<8x32xf32> -> vector<8x32xf32>
    %24 = vector.broadcast %7 : vector<1x32xf32> to vector<8x32xf32>
    %25 = arith.addf %23, %24 : vector<8x32xf32>
    %26 = arith.mulf %21, %25 : vector<8x32xf32>
    %27 = vector.extract_strided_slice %4 {offsets = [0, 0], sizes = [32, 32], strides = [1, 1]} : vector<32x128xf32> to vector<32x32xf32>
    %28 = vector.extract_strided_slice %4 {offsets = [0, 32], sizes = [32, 32], strides = [1, 1]} : vector<32x128xf32> to vector<32x32xf32>
    %29 = vector.extract_strided_slice %10 {offsets = [0, 0], sizes = [1, 32], strides = [1, 1]} : vector<1x128xf32> to vector<1x32xf32>
    %30 = vector.extract_strided_slice %10 {offsets = [0, 32], sizes = [1, 32], strides = [1, 1]} : vector<1x128xf32> to vector<1x32xf32>
    %cst_7 = arith.constant dense<0.000000e+00> : vector<8x32xf32>
    %31 = tpu.matmul %26, %27, %cst_7 {dimension_numbers = #tpu.dot_dimension_numbers<[1], [0], [0], [1], [0, 0, 1, 1], [], []>} : vector<8x32xf32>, vector<32x32xf32>, vector<8x32xf32> -> vector<8x32xf32>
    %32 = vector.broadcast %29 : vector<1x32xf32> to vector<8x32xf32>
    %33 = arith.addf %31, %32 : vector<8x32xf32>
    %cst_8 = arith.constant 0.000000e+00 : f32
    %34 = vector.broadcast %cst_8 : f32 to vector<8x32xf32>
    %35 = arith.maximumf %33, %34 : vector<8x32xf32>
    %cst_9 = arith.constant dense<0.000000e+00> : vector<8x32xf32>
    %36 = tpu.matmul %35, %28, %cst_9 {dimension_numbers = #tpu.dot_dimension_numbers<[1], [0], [0], [1], [0, 0, 1, 1], [], []>} : vector<8x32xf32>, vector<32x32xf32>, vector<8x32xf32> -> vector<8x32xf32>
    %37 = vector.broadcast %30 : vector<1x32xf32> to vector<8x32xf32>
    %38 = arith.addf %36, %37 : vector<8x32xf32>
    %39 = arith.addf %26, %38 : vector<8x32xf32>
    %cst_10 = arith.constant 0.000000e+00 : f32
    %40 = vector.broadcast %cst_10 : f32 to vector<8x32xf32>
    %41 = arith.maximumf %39, %40 : vector<8x32xf32>
    %42 = vector.extract_strided_slice %4 {offsets = [0, 64], sizes = [32, 32], strides = [1, 1]} : vector<32x128xf32> to vector<32x32xf32>
    %43 = vector.extract_strided_slice %4 {offsets = [0, 96], sizes = [32, 32], strides = [1, 1]} : vector<32x128xf32> to vector<32x32xf32>
    %44 = vector.extract_strided_slice %10 {offsets = [0, 64], sizes = [1, 32], strides = [1, 1]} : vector<1x128xf32> to vector<1x32xf32>
    %45 = vector.extract_strided_slice %10 {offsets = [0, 96], sizes = [1, 32], strides = [1, 1]} : vector<1x128xf32> to vector<1x32xf32>
    %cst_11 = arith.constant dense<0.000000e+00> : vector<8x32xf32>
    %46 = tpu.matmul %41, %42, %cst_11 {dimension_numbers = #tpu.dot_dimension_numbers<[1], [0], [0], [1], [0, 0, 1, 1], [], []>} : vector<8x32xf32>, vector<32x32xf32>, vector<8x32xf32> -> vector<8x32xf32>
    %47 = vector.broadcast %44 : vector<1x32xf32> to vector<8x32xf32>
    %48 = arith.addf %46, %47 : vector<8x32xf32>
    %cst_12 = arith.constant 0.000000e+00 : f32
    %49 = vector.broadcast %cst_12 : f32 to vector<8x32xf32>
    %50 = arith.maximumf %48, %49 : vector<8x32xf32>
    %cst_13 = arith.constant dense<0.000000e+00> : vector<8x32xf32>
    %51 = tpu.matmul %50, %43, %cst_13 {dimension_numbers = #tpu.dot_dimension_numbers<[1], [0], [0], [1], [0, 0, 1, 1], [], []>} : vector<8x32xf32>, vector<32x32xf32>, vector<8x32xf32> -> vector<8x32xf32>
    %52 = vector.broadcast %45 : vector<1x32xf32> to vector<8x32xf32>
    %53 = arith.addf %51, %52 : vector<8x32xf32>
    %54 = arith.addf %41, %53 : vector<8x32xf32>
    %cst_14 = arith.constant 0.000000e+00 : f32
    %55 = vector.broadcast %cst_14 : f32 to vector<8x32xf32>
    %56 = arith.maximumf %54, %55 : vector<8x32xf32>
    %cst_15 = arith.constant dense<0.000000e+00> : vector<8x128xf32>
    %57 = tpu.matmul %56, %3, %cst_15 {dimension_numbers = #tpu.dot_dimension_numbers<[1], [0], [0], [1], [0, 0, 1, 1], [], []>} : vector<8x32xf32>, vector<32x128xf32>, vector<8x128xf32> -> vector<8x128xf32>
    %58 = vector.broadcast %11 : vector<1x128xf32> to vector<8x128xf32>
    %59 = arith.addf %57, %58 : vector<8x128xf32>
    %c0_16 = arith.constant 0 : index
    %c0_17 = arith.constant 0 : index
    %60 = vector.load %arg2[%c0_16, %c0_17] : memref<8x128xf32, #tpu.memory_space<vmem>>, vector<8x128xf32>
    tpu.vector_store %arg2[%c0_16, %c0_17], %59 {strides = array<i32>} : memref<8x128xf32, #tpu.memory_space<vmem>>, vector<8x128xf32>,
    return
  }
}

</mosaic_0001>

<llo_original>
// kernel: hcd_decoder_forward.1
$region0: #{hcd_decoder_forward.1}
  #allocation0 [shape = 'u32[]', space=smem, size = 0x4, offset = 0x4, fixed_abs, tag = 'smem constant byte address 0x4 - core index']
  #allocation1 [shape = 'u32[72,128]{1,0:T(1,128)}', space=vmem, size = 0x9000, scoped, tag = 'internal scratch']
  %s0 = inlined_call_operand.vmem [shape: f32[8,128], index: 0, kind: input, shape index: {}]
  %s1 = inlined_call_operand.hbm [shape: f32[72,128], index: 1, kind: input, shape index: {}]
  %s2 = inlined_call_operand.vmem [shape: f32[8,128], index: 2, kind: output, shape index: {}]
  %s3 = sld [smem:[#allocation0]]
  $region22: #{hcd_decoder_forward.1} parent=0
    _
  %s5 = ssub.s32 1, %s3
  %s6 = scalar_select 0, %s5, %s3
  $region1: #{hcd_decoder_forward.1} parent=0
    #allocation2 [shape = 'u8[36864]{0}', space=vmem, size = 0x9000, scoped, tag = 'input window, operand 1, single buffered']
    #allocation3 [shape = 's32[1]{0}', space=sflag, size = 0x4, scoped, tag = 'scoped memory for hcd_decoder_forward.1']
    %7 = vsyncpa [#allocation3], 0
    // Predicated region
    $region2: #{hcd_decoder_forward.1} parent=1 // pred_check
      _
    $region3: #{hcd_decoder_forward.1} parent=1 // pred_check_branch
      %9 = sbr.rel (0) target = $region5
    $region4: #{hcd_decoder_forward.1} parent=1 // pred_region
      _
    $region5: #{hcd_decoder_forward.1} parent=1 // pred_fallthru
      _
    // Predicated region
    $region6: #{hcd_decoder_forward.1} parent=1 // pred_check
      _
    $region7: #{hcd_decoder_forward.1} parent=1 // pred_check_branch
      %11 = sbr.rel (0) target = $region9
    $region8: #{hcd_decoder_forward.1} parent=1 // pred_region
      %13 = vsyncadd [#allocation3], 0
      %s14 = sshll.u32 %s1, 4
      %s15 = int_to_ptr.hbm [resolvable:$true] %s14
      %s16 = sshll.u32 [#allocation2], 4
      %s17 = int_to_ptr.vmem [resolvable:$true] %s16
      %22 = dma.hbm_to_vmem [thread:$0]  %s15, 1152, %s17, [#allocation3], 128, 128, 8
    $region9: #{hcd_decoder_forward.1} parent=1 // pred_fallthru
      _
    // Predicated region
    $region10: #{hcd_decoder_forward.1} parent=1 // pred_check
      _
    $region11: #{hcd_decoder_forward.1} parent=1 // pred_check_branch
      %24 = sbr.rel (0) target = $region13
    $region12: #{hcd_decoder_forward.1} parent=1 // pred_region
      %26 = dma.done [#allocation3], 1152
    $region13: #{hcd_decoder_forward.1} parent=1 // pred_fallthru
      _
    %v27 = vld [vmem:[%s0] sm:$0xff]
    %v28 = vld [vmem:[#allocation2] sm:$0xff]
    %v29 = vld [vmem:[#allocation2 + $0x8] sm:$0xff]
    %v30 = vld [vmem:[#allocation2 + $0x10] sm:$0xff]
    %v31 = vld [vmem:[#allocation2 + $0x18] sm:$0xff]
    %v32 = vld [vmem:[#allocation2 + $0x20] sm:$0xff]
    %v33 = vld [vmem:[#allocation2 + $0x28] sm:$0xff]
    %v34 = vld [vmem:[#allocation2 + $0x30] sm:$0xff]
    %v35 = vld [vmem:[#allocation2 + $0x38] sm:$0xff]
    %v36 = vld [vmem:[#allocation2 + $0x40] sm:$0xff]
    %v37 = vperm.slane %v36, 0
    %v38 = vmul.f32 %v27, %v37
    %40 = vrot.lane.b32.xlu0 %v37, 96
    %v41 = vpop.permute.xlu0 %40
    %v43 = vadd.f32 %v38, %v41
    %v44 = vmax.f32 %v43, 0.0
    %vm45 = vcmask 261120
    %v47 = vsel %vm45, %v27, 0
    %49 = vmatpush.msra.mxu0 0.0
    %50 = vmatpush.msra.mxu0 0.0
    %51 = vmatpush.msra.mxu0 0.0
    %52 = vmatpush.msra.mxu0 0.0
    %53 = vmatpush.msra.mxu0 0.0
    %54 = vmatpush.msra.mxu0 0.0
    %55 = vmatpush.msra.mxu0 0.0
    %56 = vmatpush.msra.mxu0 0.0
    %57 = vmatpush.msra.mxu0 0.0
    %58 = vmatpush.msra.mxu0 0.0
    %59 = vmatpush.msra.mxu0 0.0
    %60 = vmatpush.msra.mxu0 0.0
    %61 = vmatpush.msra.mxu0 %v31
    %62 = vmatpush.msra.mxu0 %v30
    %63 = vmatpush.msra.mxu0 %v29
    %64 = vmatpush.msra.mxu0 %v28
    %65 = vmatmul.f32.gmra.mxu0 %v47
    %v66 = vpop.f32.mrf.mxu0
    %v67 = vadd.f32 %v37, %v66
    %68 = vdwg.mxu0
    %70 = vrot.lane.b32.xlu0 %v44, 64
    %v71 = vpop.permute.xlu0 %70
    %76 = vrot.lane.b32.xlu0 %v28, 96
    %v77 = vpop.permute.xlu0 %76
    %78 = vrot.lane.b32.xlu0 %v29, 96
    %v79 = vpop.permute.xlu0 %78
    %80 = vrot.lane.b32.xlu0 %v30, 96
    %v81 = vpop.permute.xlu0 %80
    %82 = vrot.lane.b32.xlu0 %v31, 96
    %v83 = vpop.permute.xlu0 %82
    %v88 = vsel %vm45, %v71, 0
    %90 = vmatpush.msra.mxu0 0.0
    %91 = vmatpush.msra.mxu0 0.0
    %92 = vmatpush.msra.mxu0 0.0
    %93 = vmatpush.msra.mxu0 0.0
    %94 = vmatpush.msra.mxu0 0.0
    %95 = vmatpush.msra.mxu0 0.0
    %96 = vmatpush.msra.mxu0 0.0
    %97 = vmatpush.msra.mxu0 0.0
    %98 = vmatpush.msra.mxu0 0.0
    %99 = vmatpush.msra.mxu0 0.0
    %100 = vmatpush.msra.mxu0 0.0
    %101 = vmatpush.msra.mxu0 0.0
    %102 = vmatpush.msra.mxu0 %v83
    %103 = vmatpush.msra.mxu0 %v81
    %104 = vmatpush.msra.mxu0 %v79
    %105 = vmatpush.msra.mxu0 %v77
    %106 = vmatmul.f32.gmra.mxu0 %v88
    %v107 = vpop.f32.mrf.mxu0
    %v108 = vadd.f32 %v41, %v107
    %109 = vdwg.mxu0
    %v110 = vmul.f32 %v67, %v108
    %v111 = vperm.slane %v36, 1
    %v113 = vsel %vm45, %v110, 0
    %115 = vmatpush.msra.mxu0 0.0
    %116 = vmatpush.msra.mxu0 0.0
    %117 = vmatpush.msra.mxu0 0.0
    %118 = vmatpush.msra.mxu0 0.0
    %119 = vmatpush.msra.mxu0 0.0
    %120 = vmatpush.msra.mxu0 0.0
    %121 = vmatpush.msra.mxu0 0.0
    %122 = vmatpush.msra.mxu0 0.0
    %123 = vmatpush.msra.mxu0 0.0
    %124 = vmatpush.msra.mxu0 0.0
    %125 = vmatpush.msra.mxu0 0.0
    %126 = vmatpush.msra.mxu0 0.0
    %127 = vmatpush.msra.mxu0 %v35
    %128 = vmatpush.msra.mxu0 %v34
    %129 = vmatpush.msra.mxu0 %v33
    %130 = vmatpush.msra.mxu0 %v32
    %131 = vmatmul.f32.gmra.mxu0 %v113
    %v132 = vpop.f32.mrf.mxu0
    %v133 = vadd.f32 %v111, %v132
    %134 = vdwg.mxu0
    %v135 = vmax.f32 %v133, 0.0
    %140 = vrot.lane.b32.xlu0 %v32, 96
    %v141 = vpop.permute.xlu0 %140
    %142 = vrot.lane.b32.xlu0 %v33, 96
    %v143 = vpop.permute.xlu0 %142
    %144 = vrot.lane.b32.xlu0 %v34, 96
    %v145 = vpop.permute.xlu0 %144
    %146 = vrot.lane.b32.xlu0 %v35, 96
    %v147 = vpop.permute.xlu0 %146
    %153 = vrot.lane.b32.xlu0 %v111, 96
    %v154 = vpop.permute.xlu0 %153
    %v157 = vsel %vm45, %v135, 0
    %159 = vmatpush.msra.mxu0 0.0
    %160 = vmatpush.msra.mxu0 0.0
    %161 = vmatpush.msra.mxu0 0.0
    %162 = vmatpush.msra.mxu0 0.0
    %163 = vmatpush.msra.mxu0 0.0
    %164 = vmatpush.msra.mxu0 0.0
    %165 = vmatpush.msra.mxu0 0.0
    %166 = vmatpush.msra.mxu0 0.0
    %167 = vmatpush.msra.mxu0 0.0
    %168 = vmatpush.msra.mxu0 0.0
    %169 = vmatpush.msra.mxu0 0.0
    %170 = vmatpush.msra.mxu0 0.0
    %171 = vmatpush.msra.mxu0 %v147
    %172 = vmatpush.msra.mxu0 %v145
    %173 = vmatpush.msra.mxu0 %v143
    %174 = vmatpush.msra.mxu0 %v141
    %175 = vmatmul.f32.gmra.mxu0 %v157
    %v176 = vpop.f32.mrf.mxu0
    %v177 = vadd.f32 %v154, %v176
    %178 = vdwg.mxu0
    %v179 = vadd.f32 %v110, %v177
    %v180 = vmax.f32 %v179, 0.0
    %181 = vrot.lane.b32.xlu0 %v32, 64
    %v182 = vpop.permute.xlu0 %181
    %183 = vrot.lane.b32.xlu0 %v33, 64
    %v184 = vpop.permute.xlu0 %183
    %185 = vrot.lane.b32.xlu0 %v34, 64
    %v186 = vpop.permute.xlu0 %185
    %187 = vrot.lane.b32.xlu0 %v35, 64
    %v188 = vpop.permute.xlu0 %187
    %193 = vrot.lane.b32.xlu0 %v111, 64
    %v194 = vpop.permute.xlu0 %193
    %v197 = vsel %vm45, %v180, 0
    %199 = vmatpush.msra.mxu0 0.0
    %200 = vmatpush.msra.mxu0 0.0
    %201 = vmatpush.msra.mxu0 0.0
    %202 = vmatpush.msra.mxu0 0.0
    %203 = vmatpush.msra.mxu0 0.0
    %204 = vmatpush.msra.mxu0 0.0
    %205 = vmatpush.msra.mxu0 0.0
    %206 = vmatpush.msra.mxu0 0.0
    %207 = vmatpush.msra.mxu0 0.0
    %208 = vmatpush.msra.mxu0 0.0
    %209 = vmatpush.msra.mxu0 0.0
    %210 = vmatpush.msra.mxu0 0.0
    %211 = vmatpush.msra.mxu0 %v188
    %212 = vmatpush.msra.mxu0 %v186
    %213 = vmatpush.msra.mxu0 %v184
    %214 = vmatpush.msra.mxu0 %v182
    %215 = vmatmul.f32.gmra.mxu0 %v197
    %v216 = vpop.f32.mrf.mxu0
    %v217 = vadd.f32 %v194, %v216
    %218 = vdwg.mxu0
    %v219 = vmax.f32 %v217, 0.0
    %220 = vrot.lane.b32.xlu0 %v32, 32
    %v221 = vpop.permute.xlu0 %220
    %222 = vrot.lane.b32.xlu0 %v33, 32
    %v223 = vpop.permute.xlu0 %222
    %224 = vrot.lane.b32.xlu0 %v34, 32
    %v225 = vpop.permute.xlu0 %224
    %226 = vrot.lane.b32.xlu0 %v35, 32
    %v227 = vpop.permute.xlu0 %226
    %232 = vrot.lane.b32.xlu0 %v111, 32
    %v233 = vpop.permute.xlu0 %232
    %v236 = vsel %vm45, %v219, 0
    %238 = vmatpush.msra.mxu0 0.0
    %239 = vmatpush.msra.mxu0 0.0
    %240 = vmatpush.msra.mxu0 0.0
    %241 = vmatpush.msra.mxu0 0.0
    %242 = vmatpush.msra.mxu0 0.0
    %243 = vmatpush.msra.mxu0 0.0
    %244 = vmatpush.msra.mxu0 0.0
    %245 = vmatpush.msra.mxu0 0.0
    %246 = vmatpush.msra.mxu0 0.0
    %247 = vmatpush.msra.mxu0 0.0
    %248 = vmatpush.msra.mxu0 0.0
    %249 = vmatpush.msra.mxu0 0.0
    %250 = vmatpush.msra.mxu0 %v227
    %251 = vmatpush.msra.mxu0 %v225
    %252 = vmatpush.msra.mxu0 %v223
    %253 = vmatpush.msra.mxu0 %v221
    %254 = vmatmul.f32.gmra.mxu0 %v236
    %v255 = vpop.f32.mrf.mxu0
    %v256 = vadd.f32 %v233, %v255
    %257 = vdwg.mxu0
    %v258 = vadd.f32 %v180, %v256
    %v259 = vmax.f32 %v258, 0.0
    %v260 = vperm.slane %v36, 2
    %v262 = vsel %vm45, %v259, 0
    %264 = vmatpush.msra.mxu0 0.0
    %265 = vmatpush.msra.mxu0 0.0
    %266 = vmatpush.msra.mxu0 0.0
    %267 = vmatpush.msra.mxu0 0.0
    %268 = vmatpush.msra.mxu0 0.0
    %269 = vmatpush.msra.mxu0 0.0
    %270 = vmatpush.msra.mxu0 0.0
    %271 = vmatpush.msra.mxu0 0.0
    %272 = vmatpush.msra.mxu0 0.0
    %273 = vmatpush.msra.mxu0 0.0
    %274 = vmatpush.msra.mxu0 0.0
    %275 = vmatpush.msra.mxu0 0.0
    %276 = vmatpush.msra.mxu0 %v31
    %277 = vmatpush.msra.mxu0 %v30
    %278 = vmatpush.msra.mxu0 %v29
    %279 = vmatpush.msra.mxu0 %v28
    %280 = vmatmul.f32.gmra.mxu0 %v262
    %v281 = vpop.f32.mrf.mxu0
    %v282 = vadd.f32 %v260, %v281
    %283 = vdwg.mxu0
    %284 = vst [vmem:[%s2] sm:$0xff] %v282
    // Predicated region
    $region14: #{hcd_decoder_forward.1} parent=1 // pred_check
      _
    $region15: #{hcd_decoder_forward.1} parent=1 // pred_check_branch
      %286 = sbr.rel (0) target = $region17
    $region16: #{hcd_decoder_forward.1} parent=1 // pred_region
      _
    $region17: #{hcd_decoder_forward.1} parent=1 // pred_fallthru
      _
    // Predicated region
    $region18: #{hcd_decoder_forward.1} parent=1 // pred_check
      _
    $region19: #{hcd_decoder_forward.1} parent=1 // pred_check_branch
      %288 = sbr.rel (0) target = $region21
    $region20: #{hcd_decoder_forward.1} parent=1 // pred_region
      _
    $region21: #{hcd_decoder_forward.1} parent=1 // pred_fallthru
      _
    %289 = vsyncpa [#allocation3], 1

</llo_original>
